<compile_context>
chip_gen: v5e
topology: v5e:2x2
jax: 0.10.0
libtpu: 0.0.40
codegen_flags: <defaults>
</compile_context>

<pallas_src>
import functools

import jax
import jax.numpy as jnp
from jax.experimental import pallas as pl
from jax.experimental.pallas import tpu as pltpu


def _propogator_kernel(x_ref, wrz_ref, brz_ref, wt_ref, bt_ref, o_ref):
    """Blocks arrive in natural (tile_n, D) node-major layout.

    The kernel flips to feature-major (D, tile_n) internally so the node
    dimension sits on the 128-wide lane axis for all VPU/EUP/MXU work; the two
    transposes ride the otherwise-idle XLU slot and hide under the DMA.
    """
    xt = x_ref[...].T                                    # (D, tn)  XLU transpose
    d = xt.shape[0]

    # Fused reset+update gate projection: single MXU pass, M=2D, K=D, N=tn.
    v = (jnp.dot(wrz_ref[...], xt, preferred_element_type=jnp.float32)
         + brz_ref[...])                                 # (2D, tn)
    # sigmoid(v) == 0.5 * (tanh(v / 2) + 1): one EUP op instead of exp + recip.
    rz = 0.5 * (jnp.tanh(0.5 * v) + 1.0)
    r = rz[:d, :]                                        # sublane-aligned split
    z = rz[d:, :]

    # Candidate state: (D, D) @ (D, tn); input gated by r.
    h_hat = jnp.tanh(
        jnp.dot(wt_ref[...], r * xt, preferred_element_type=jnp.float32)
        + bt_ref[...])

    # GRU-style blend (VPU), then back to node-major for a natural-layout store.
    o_ref[...] = ((1.0 - z) * xt + z * h_hat).T          # (tn, D)  XLU transpose


def _round_up(a, m):
    return ((a + m - 1) // m) * m


@functools.partial(jax.jit, static_argnames=("tile_n",))
def propogator(x, wr, br, wz, bz, wt, bt, *, tile_n=4096):
    """x: (N, D) f32; w*: (D, D) in PyTorch (out, in) layout; b*: (D,)."""
    n, d = x.shape
    assert tile_n % 128 == 0, "tile_n must be a multiple of 128"

    # Fuse reset/update gate params along the output dim so the kernel does one
    # wider matmul; reshape biases to column vectors for feature-major broadcast.
    wrz = jnp.concatenate([wr, wz], axis=0)              # (2D, D)
    brz = jnp.concatenate([br, bz]).reshape(2 * d, 1)    # (2D, 1)
    bt2 = bt.reshape(d, 1)                               # (D, 1)

    if n <= 128:
        # Tiny problem: one grid step, block == full array (exempt from the
        # (8, 128) divisibility rule).
        tile, n_pad = n, n
    else:
        # >= 2 grid steps so v7x's two TensorCores both get work; tiles are
        # multiples of 128 so the node axis is lane-dense after the in-kernel
        # transpose.
        tile = min(tile_n, _round_up(pl.cdiv(n, 2), 128))
        n_pad = _round_up(n, tile)

    x_in = x if n_pad == n else jnp.pad(x, ((0, n_pad - n), (0, 0)))

    act_spec = pl.BlockSpec((tile, d), lambda i: (i, 0))
    # Constant index_maps: parameters are fetched once and stay VMEM-resident.
    wrz_spec = pl.BlockSpec((2 * d, d), lambda i: (0, 0))
    brz_spec = pl.BlockSpec((2 * d, 1), lambda i: (0, 0))
    wt_spec = pl.BlockSpec((d, d), lambda i: (0, 0))
    bt_spec = pl.BlockSpec((d, 1), lambda i: (0, 0))

    out = pl.pallas_call(
        _propogator_kernel,
        out_shape=jax.ShapeDtypeStruct((n_pad, d), x.dtype),
        grid=(n_pad // tile,),
        in_specs=[act_spec, wrz_spec, brz_spec, wt_spec, bt_spec],
        out_specs=act_spec,
        compiler_params=pltpu.CompilerParams(
            dimension_semantics=("parallel",)),
    )(x_in, wrz, brz, wt, bt2)

    return out if n_pad == n else out[:n]


def propogator_ref(x, wr, br, wz, bz, wt, bt):
    r = jax.nn.sigmoid(x @ wr.T + br)
    z = jax.nn.sigmoid(x @ wz.T + bz)
    h_hat = jnp.tanh((r * x) @ wt.T + bt)
    return (1.0 - z) * x + z * h_hat


if __name__ == "__main__":
    node_edge_dim = 32   # hidden feature dim D

    key = jax.random.PRNGKey(0)
    kx, kwr, kbr, kwz, kbz, kwt, kbt = jax.random.split(key, 7)

    # Deterministic parameter init (PyTorch Linear default: U(-1/sqrt(D), 1/sqrt(D))).
    bound = 1.0 / jnp.sqrt(jnp.float32(node_edge_dim))
    shape_w = (node_edge_dim, node_edge_dim)
    wr = jax.random.uniform(kwr, shape_w, jnp.float32, -bound, bound)
    br = jax.random.uniform(kbr, (node_edge_dim,), jnp.float32, -bound, bound)
    wz = jax.random.uniform(kwz, shape_w, jnp.float32, -bound, bound)
    bz = jax.random.uniform(kbz, (node_edge_dim,), jnp.float32, -bound, bound)
    wt = jax.random.uniform(kwt, shape_w, jnp.float32, -bound, bound)
    bt = jax.random.uniform(kbt, (node_edge_dim,), jnp.float32, -bound, bound)

    # Small case: single grid step (matches the module's typical demo size).
    num_nodes = 16
    x_small = jax.random.normal(kx, (num_nodes, node_edge_dim), jnp.float32)
    out_small = jax.block_until_ready(propogator(x_small, wr, br, wz, bz, wt, bt))
    exp_small = propogator_ref(x_small, wr, br, wz, bz, wt, bt)
    assert out_small.shape == (num_nodes, node_edge_dim)
    assert jnp.allclose(out_small, exp_small, atol=1e-5, rtol=1e-4), (
        "Pallas output (small N) does not match reference")

    # Larger case exercising the multi-step (padded, 2-tile) path.
    num_nodes_big = 300
    x_big = jax.random.normal(kx, (num_nodes_big, node_edge_dim), jnp.float32)
    out_big = jax.block_until_ready(propogator(x_big, wr, br, wz, bz, wt, bt))
    exp_big = propogator_ref(x_big, wr, br, wz, bz, wt, bt)
    assert out_big.shape == (num_nodes_big, node_edge_dim)
    assert jnp.allclose(out_big, exp_big, atol=1e-5, rtol=1e-4), (
        "Pallas output (large N) does not match reference")

    print("KERNEL_OK")
</pallas_src>

<mosaic_0001>
module attributes {stable_mosaic.version = 11 : i64} {
  func.func @_propogator_kernel(%arg0: i32, %arg1: memref<16x32xf32, #tpu.memory_space<vmem>>, %arg2: memref<64x32xf32, #tpu.memory_space<vmem>>, %arg3: memref<64x1xf32, #tpu.memory_space<vmem>>, %arg4: memref<32x32xf32, #tpu.memory_space<vmem>>, %arg5: memref<32x1xf32, #tpu.memory_space<vmem>>, %arg6: memref<16x32xf32, #tpu.memory_space<vmem>>) attributes {dimension_semantics = [#tpu.dimension_semantics<parallel>], iteration_bounds = array<i64: 1>, scalar_prefetch = 0 : i64, scratch_operands = 0 : i64, tpu.core_type = #tpu.core_type<tc>, window_params = [{transform_indices = @transform_0, window_bounds = array<i64: 16, 32>}, {pipeline_mode = #tpu.pipeline_mode<synchronous>, transform_indices = @transform_1, window_bounds = array<i64: 64, 32>}, {pipeline_mode = #tpu.pipeline_mode<synchronous>, transform_indices = @transform_2, window_bounds = array<i64: 64, 1>}, {pipeline_mode = #tpu.pipeline_mode<synchronous>, transform_indices = @transform_3, window_bounds = array<i64: 32, 32>}, {pipeline_mode = #tpu.pipeline_mode<synchronous>, transform_indices = @transform_4, window_bounds = array<i64: 32, 1>}, {transform_indices = @transform_5, window_bounds = array<i64: 16, 32>}]} {
    %c0 = arith.constant 0 : index
    %c0_0 = arith.constant 0 : index
    %0 = vector.load %arg1[%c0, %c0_0] : memref<16x32xf32, #tpu.memory_space<vmem>>, vector<16x32xf32>
    %1 = tpu.transpose %0, [1, 0] : vector<16x32xf32> -> vector<32x16xf32>
    %c0_1 = arith.constant 0 : index
    %c0_2 = arith.constant 0 : index
    %2 = vector.load %arg2[%c0_1, %c0_2] : memref<64x32xf32, #tpu.memory_space<vmem>>, vector<64x32xf32>
    %cst = arith.constant dense<0.000000e+00> : vector<64x16xf32>
    %3 = tpu.matmul %2, %1, %cst {dimension_numbers = #tpu.dot_dimension_numbers<[1], [0], [0], [1], [0, 0, 1, 1], [], []>} : vector<64x32xf32>, vector<32x16xf32>, vector<64x16xf32> -> vector<64x16xf32>
    %c0_3 = arith.constant 0 : index
    %c0_4 = arith.constant 0 : index
    %4 = vector.load %arg3[%c0_3, %c0_4] : memref<64x1xf32, #tpu.memory_space<vmem>>, vector<64x1xf32>
    %5 = vector.broadcast %4 : vector<64x1xf32> to vector<64x16xf32>
    %6 = arith.addf %3, %5 : vector<64x16xf32>
    %cst_5 = arith.constant 5.000000e-01 : f32
    %7 = vector.broadcast %cst_5 : f32 to vector<64x16xf32>
    %8 = arith.mulf %7, %6 : vector<64x16xf32>
    %9 = math.tanh %8 : vector<64x16xf32>
    %cst_6 = arith.constant 1.000000e+00 : f32
    %10 = vector.broadcast %cst_6 : f32 to vector<64x16xf32>
    %11 = arith.addf %9, %10 : vector<64x16xf32>
    %cst_7 = arith.constant 5.000000e-01 : f32
    %12 = vector.broadcast %cst_7 : f32 to vector<64x16xf32>
    %13 = arith.mulf %12, %11 : vector<64x16xf32>
    %14 = vector.extract_strided_slice %13 {offsets = [0, 0], sizes = [32, 16], strides = [1, 1]} : vector<64x16xf32> to vector<32x16xf32>
    %15 = vector.extract_strided_slice %13 {offsets = [32, 0], sizes = [32, 16], strides = [1, 1]} : vector<64x16xf32> to vector<32x16xf32>
    %c0_8 = arith.constant 0 : index
    %c0_9 = arith.constant 0 : index
    %16 = vector.load %arg4[%c0_8, %c0_9] : memref<32x32xf32, #tpu.memory_space<vmem>>, vector<32x32xf32>
    %17 = arith.mulf %14, %1 : vector<32x16xf32>
    %cst_10 = arith.constant dense<0.000000e+00> : vector<32x16xf32>
    %18 = tpu.matmul %16, %17, %cst_10 {dimension_numbers = #tpu.dot_dimension_numbers<[1], [0], [0], [1], [0, 0, 1, 1], [], []>} : vector<32x32xf32>, vector<32x16xf32>, vector<32x16xf32> -> vector<32x16xf32>
    %c0_11 = arith.constant 0 : index
    %c0_12 = arith.constant 0 : index
    %19 = vector.load %arg5[%c0_11, %c0_12] : memref<32x1xf32, #tpu.memory_space<vmem>>, vector<32x1xf32>
    %20 = vector.broadcast %19 : vector<32x1xf32> to vector<32x16xf32>
    %21 = arith.addf %18, %20 : vector<32x16xf32>
    %22 = math.tanh %21 : vector<32x16xf32>
    %cst_13 = arith.constant 1.000000e+00 : f32
    %23 = vector.broadcast %cst_13 : f32 to vector<32x16xf32>
    %24 = arith.subf %23, %15 : vector<32x16xf32>
    %25 = arith.mulf %24, %1 : vector<32x16xf32>
    %26 = arith.mulf %15, %22 : vector<32x16xf32>
    %27 = arith.addf %25, %26 : vector<32x16xf32>
    %28 = tpu.transpose %27, [1, 0] : vector<32x16xf32> -> vector<16x32xf32>
    %c0_14 = arith.constant 0 : index
    %c0_15 = arith.constant 0 : index
    %29 = vector.load %arg6[%c0_14, %c0_15] : memref<16x32xf32, #tpu.memory_space<vmem>>, vector<16x32xf32>
    tpu.vector_store %arg6[%c0_14, %c0_15], %28 {strides = array<i32>} : memref<16x32xf32, #tpu.memory_space<vmem>>, vector<16x32xf32>,
    return
  }
  func.func @transform_0(%arg0: i32) -> (i32, i32) {
    %c0_i32 = arith.constant 0 : i32
    %c0_i32_0 = arith.constant 0 : i32
    return %arg0, %c0_i32 : i32, i32
  }
  func.func @transform_1(%arg0: i32) -> (i32, i32) {
    %c0_i32 = arith.constant 0 : i32
    %c0_i32_0 = arith.constant 0 : i32
    %c0_i32_1 = arith.constant 0 : i32
    return %c0_i32, %c0_i32_0 : i32, i32
  }
  func.func @transform_2(%arg0: i32) -> (i32, i32) {
    %c0_i32 = arith.constant 0 : i32
    %c0_i32_0 = arith.constant 0 : i32
    %c0_i32_1 = arith.constant 0 : i32
    return %c0_i32, %c0_i32_0 : i32, i32
  }
  func.func @transform_3(%arg0: i32) -> (i32, i32) {
    %c0_i32 = arith.constant 0 : i32
    %c0_i32_0 = arith.constant 0 : i32
    %c0_i32_1 = arith.constant 0 : i32
    return %c0_i32, %c0_i32_0 : i32, i32
  }
  func.func @transform_4(%arg0: i32) -> (i32, i32) {
    %c0_i32 = arith.constant 0 : i32
    %c0_i32_0 = arith.constant 0 : i32
    %c0_i32_1 = arith.constant 0 : i32
    return %c0_i32, %c0_i32_0 : i32, i32
  }
  func.func @transform_5(%arg0: i32) -> (i32, i32) {
    %c0_i32 = arith.constant 0 : i32
    %c0_i32_0 = arith.constant 0 : i32
    return %arg0, %c0_i32 : i32, i32
  }
}

</mosaic_0001>

<llo_original>
// kernel: propogator.1
$region0: #{propogator.1}
  #allocation0 [shape = 'u32[]', space=smem, size = 0x4, offset = 0x4, fixed_abs, tag = 'smem constant byte address 0x4 - core index']
  #allocation1 [shape = 'u32[72,128]{1,0:T(1,128)}', space=vmem, size = 0x9000, scoped, tag = 'internal scratch']
  %s0 = inlined_call_operand.vmem [shape: f32[16,32], index: 0, kind: input, shape index: {}]
  %s1 = inlined_call_operand.vmem [shape: f32[64,32], index: 1, kind: input, shape index: {}]
  %s2 = inlined_call_operand.vmem [shape: f32[64,1], index: 2, kind: input, shape index: {}]
  %s3 = inlined_call_operand.vmem [shape: f32[32,32], index: 3, kind: input, shape index: {}]
  %s4 = inlined_call_operand.vmem [shape: f32[32,1], index: 4, kind: input, shape index: {}]
  %s5 = inlined_call_operand.hbm [shape: f32[16,32], index: 5, kind: output, shape index: {}]
  %s6 = sld [smem:[#allocation0]]
  $region30: #{propogator.1} parent=0
    _
  %s8 = ssub.s32 1, %s6
  %s9 = scalar_select 0, %s8, %s6
  $region1: #{propogator.1} parent=0
    #allocation2 [shape = 'u8[8192]{0}', space=vmem, size = 0x2000, scoped, tag = 'output window, operand 0, single buffered']
    #allocation3 [shape = 's32[1]{0}', space=sflag, size = 0x4, scoped, tag = 'scoped memory for propogator.1']
    %10 = vsyncpa [#allocation3], 0
    // Predicated region
    $region2: #{propogator.1} parent=1 // pred_check
      _
    $region3: #{propogator.1} parent=1 // pred_check_branch
      %12 = sbr.rel (0) target = $region5
    $region4: #{propogator.1} parent=1 // pred_region
      _
    $region5: #{propogator.1} parent=1 // pred_fallthru
      _
    // Predicated region
    $region6: #{propogator.1} parent=1 // pred_check
      _
    $region7: #{propogator.1} parent=1 // pred_check_branch
      %14 = sbr.rel (0) target = $region9
    $region8: #{propogator.1} parent=1 // pred_region
      _
    $region9: #{propogator.1} parent=1 // pred_fallthru
      _
    // Predicated region
    $region10: #{propogator.1} parent=1 // pred_check
      _
    $region11: #{propogator.1} parent=1 // pred_check_branch
      %16 = sbr.rel (0) target = $region13
    $region12: #{propogator.1} parent=1 // pred_region
      _
    $region13: #{propogator.1} parent=1 // pred_fallthru
      _
    // Predicated region
    $region14: #{propogator.1} parent=1 // pred_check
      _
    $region15: #{propogator.1} parent=1 // pred_check_branch
      %18 = sbr.rel (0) target = $region17
    $region16: #{propogator.1} parent=1 // pred_region
      _
    $region17: #{propogator.1} parent=1 // pred_fallthru
      _
    // Predicated region
    $region18: #{propogator.1} parent=1 // pred_check
      _
    $region19: #{propogator.1} parent=1 // pred_check_branch
      %20 = sbr.rel (0) target = $region21
    $region20: #{propogator.1} parent=1 // pred_region
      _
    $region21: #{propogator.1} parent=1 // pred_fallthru
      _
    %v21 = vld [vmem:[%s0] sm:$0xff]
    %v22 = vld [vmem:[%s0 + $0x8] sm:$0xff]
    %23 = vxpose.xlu0.b32.start [1/16] %v21, 128
    %24 = vxpose.xlu0.b32.cont [2/16] %v22, 128
    %25 = vxpose.xlu0.b32.cont [3/16] 0.0, 128
    %26 = vxpose.xlu0.b32.cont [4/16] 0.0, 128
    %27 = vxpose.xlu0.b32.cont [5/16] 0.0, 128
    %28 = vxpose.xlu0.b32.cont [6/16] 0.0, 128
    %29 = vxpose.xlu0.b32.cont [7/16] 0.0, 128
    %30 = vxpose.xlu0.b32.cont [8/16] 0.0, 128
    %31 = vxpose.xlu0.b32.cont [9/16] 0.0, 128
    %32 = vxpose.xlu0.b32.cont [10/16] 0.0, 128
    %33 = vxpose.xlu0.b32.cont [11/16] 0.0, 128
    %34 = vxpose.xlu0.b32.cont [12/16] 0.0, 128
    %35 = vxpose.xlu0.b32.cont [13/16] 0.0, 128
    %36 = vxpose.xlu0.b32.cont [14/16] 0.0, 128
    %37 = vxpose.xlu0.b32.cont [15/16] 0.0, 128
    %38 = vxpose.xlu0.b32.end [16/16] 0.0, 128
    %v39 = vpop.trf.xlu0
    %v40 = vpop.trf.xlu0
    %v41 = vpop.trf.xlu0
    %v42 = vpop.trf.xlu0
    %v43 = vpop.trf.xlu0
    %v44 = vpop.trf.xlu0
    %v45 = vpop.trf.xlu0
    %v46 = vpop.trf.xlu0
    %v47 = vpop.trf.xlu0
    %v48 = vpop.trf.xlu0
    %v49 = vpop.trf.xlu0
    %v50 = vpop.trf.xlu0
    %v51 = vpop.trf.xlu0
    %v52 = vpop.trf.xlu0
    %v53 = vpop.trf.xlu0
    %v54 = vpop.trf.xlu0
    %v55 = vld [vmem:[%s1] sm:$0xff]
    %v56 = vld [vmem:[%s1 + $0x8] sm:$0xff]
    %v57 = vld [vmem:[%s1 + $0x10] sm:$0xff]
    %v58 = vld [vmem:[%s1 + $0x18] sm:$0xff]
    %v59 = vld [vmem:[%s1 + $0x20] sm:$0xff]
    %v60 = vld [vmem:[%s1 + $0x28] sm:$0xff]
    %v61 = vld [vmem:[%s1 + $0x30] sm:$0xff]
    %v62 = vld [vmem:[%s1 + $0x38] sm:$0xff]
    %v63 = vld [vmem:[%s2] sm:$0xff]
    %v64 = vld [vmem:[%s2 + $0x8] sm:$0xff]
    %v65 = vld [vmem:[%s2 + $0x10] sm:$0xff]
    %v66 = vld [vmem:[%s2 + $0x18] sm:$0xff]
    %v67 = vld [vmem:[%s2 + $0x20] sm:$0xff]
    %v68 = vld [vmem:[%s2 + $0x28] sm:$0xff]
    %v69 = vld [vmem:[%s2 + $0x30] sm:$0xff]
    %v70 = vld [vmem:[%s2 + $0x38] sm:$0xff]
    %72 = vset.pattern.permute.xlu0 0
    %73 = vperm.xlu0 %72, %v63
    %v74 = vpop.permute.xlu0 %73
    %77 = vset.pattern.permute.xlu0 0
    %78 = vperm.xlu0 %77, %v64
    %v79 = vpop.permute.xlu0 %78
    %82 = vset.pattern.permute.xlu0 0
    %83 = vperm.xlu0 %82, %v65
    %v84 = vpop.permute.xlu0 %83
    %87 = vset.pattern.permute.xlu0 0
    %88 = vperm.xlu0 %87, %v66
    %v89 = vpop.permute.xlu0 %88
    %92 = vset.pattern.permute.xlu0 0
    %93 = vperm.xlu0 %92, %v67
    %v94 = vpop.permute.xlu0 %93
    %97 = vset.pattern.permute.xlu0 0
    %98 = vperm.xlu0 %97, %v68
    %v99 = vpop.permute.xlu0 %98
    %102 = vset.pattern.permute.xlu0 0
    %103 = vperm.xlu0 %102, %v69
    %v104 = vpop.permute.xlu0 %103
    %107 = vset.pattern.permute.xlu0 0
    %108 = vperm.xlu0 %107, %v70
    %v109 = vpop.permute.xlu0 %108
    %vm111 = vcmask 261120
    %v113 = vsel %vm111, %v55, 0
    %v116 = vsel %vm111, %v56, 0
    %v119 = vsel %vm111, %v57, 0
    %v122 = vsel %vm111, %v58, 0
    %v125 = vsel %vm111, %v59, 0
    %v128 = vsel %vm111, %v60, 0
    %v131 = vsel %vm111, %v61, 0
    %v134 = vsel %vm111, %v62, 0
    %136 = vmatpush.msra.mxu0 0.0
    %137 = vmatpush.msra.mxu0 0.0
    %138 = vmatpush.msra.mxu0 0.0
    %139 = vmatpush.msra.mxu0 0.0
    %140 = vmatpush.msra.mxu0 0.0
    %141 = vmatpush.msra.mxu0 0.0
    %142 = vmatpush.msra.mxu0 0.0
    %143 = vmatpush.msra.mxu0 0.0
    %144 = vmatpush.msra.mxu0 0.0
    %145 = vmatpush.msra.mxu0 0.0
    %146 = vmatpush.msra.mxu0 0.0
    %147 = vmatpush.msra.mxu0 0.0
    %148 = vmatpush.msra.mxu0 %v42
    %149 = vmatpush.msra.mxu0 %v41
    %150 = vmatpush.msra.mxu0 %v40
    %151 = vmatpush.msra.mxu0 %v39
    %152 = vmatmul.f32.gmra.mxu0 %v113
    %v153 = vpop.f32.mrf.mxu0
    %v154 = vadd.f32 %v74, %v153
    %155 = vmatmul.f32.gmra.mxu0 %v116
    %v156 = vpop.f32.mrf.mxu0
    %v157 = vadd.f32 %v79, %v156
    %158 = vmatmul.f32.gmra.mxu0 %v119
    %v159 = vpop.f32.mrf.mxu0
    %v160 = vadd.f32 %v84, %v159
    %161 = vmatmul.f32.gmra.mxu0 %v122
    %v162 = vpop.f32.mrf.mxu0
    %v163 = vadd.f32 %v89, %v162
    %164 = vmatmul.f32.gmra.mxu0 %v125
    %v165 = vpop.f32.mrf.mxu0
    %v166 = vadd.f32 %v94, %v165
    %167 = vmatmul.f32.gmra.mxu0 %v128
    %v168 = vpop.f32.mrf.mxu0
    %v169 = vadd.f32 %v99, %v168
    %170 = vmatmul.f32.gmra.mxu0 %v131
    %v171 = vpop.f32.mrf.mxu0
    %v172 = vadd.f32 %v104, %v171
    %173 = vmatmul.f32.gmra.mxu0 %v134
    %v174 = vpop.f32.mrf.mxu0
    %v175 = vadd.f32 %v109, %v174
    %176 = vdwg.mxu0
    %v177 = vmul.f32 %v154, 0.5
    %v178 = vmul.f32 %v157, 0.5
    %v179 = vmul.f32 %v160, 0.5
    %v180 = vmul.f32 %v163, 0.5
    %v181 = vmul.f32 %v166, 0.5
    %v182 = vmul.f32 %v169, 0.5
    %v183 = vmul.f32 %v172, 0.5
    %v184 = vmul.f32 %v175, 0.5
    %v185 = vtanh.pop %v177
    %v186 = vtanh.pop %v178
    %v187 = vtanh.pop %v179
    %v188 = vtanh.pop %v180
    %v189 = vtanh.pop %v181
    %v190 = vtanh.pop %v182
    %v191 = vtanh.pop %v183
    %v192 = vtanh.pop %v184
    %v193 = vadd.f32 %v185, 1.0
    %v194 = vadd.f32 %v186, 1.0
    %v195 = vadd.f32 %v187, 1.0
    %v196 = vadd.f32 %v188, 1.0
    %v197 = vadd.f32 %v189, 1.0
    %v198 = vadd.f32 %v190, 1.0
    %v199 = vadd.f32 %v191, 1.0
    %v200 = vadd.f32 %v192, 1.0
    %v201 = vmul.f32 %v193, 0.5
    %v202 = vmul.f32 %v194, 0.5
    %v203 = vmul.f32 %v195, 0.5
    %v204 = vmul.f32 %v196, 0.5
    %v205 = vmul.f32 %v197, 0.5
    %v206 = vmul.f32 %v198, 0.5
    %v207 = vmul.f32 %v199, 0.5
    %v208 = vmul.f32 %v200, 0.5
    %v209 = vld [vmem:[%s3] sm:$0xff]
    %v210 = vld [vmem:[%s3 + $0x8] sm:$0xff]
    %v211 = vld [vmem:[%s3 + $0x10] sm:$0xff]
    %v212 = vld [vmem:[%s3 + $0x18] sm:$0xff]
    %v213 = vmul.f32 %v201, %v39
    %v214 = vmul.f32 %v202, %v40
    %v215 = vmul.f32 %v203, %v41
    %v216 = vmul.f32 %v204, %v42
    %v217 = vld [vmem:[%s4] sm:$0xff]
    %v218 = vld [vmem:[%s4 + $0x8] sm:$0xff]
    %v219 = vld [vmem:[%s4 + $0x10] sm:$0xff]
    %v220 = vld [vmem:[%s4 + $0x18] sm:$0xff]
    %222 = vset.pattern.permute.xlu0 0
    %223 = vperm.xlu0 %222, %v217
    %v224 = vpop.permute.xlu0 %223
    %227 = vset.pattern.permute.xlu0 0
    %228 = vperm.xlu0 %227, %v218
    %v229 = vpop.permute.xlu0 %228
    %232 = vset.pattern.permute.xlu0 0
    %233 = vperm.xlu0 %232, %v219
    %v234 = vpop.permute.xlu0 %233
    %237 = vset.pattern.permute.xlu0 0
    %238 = vperm.xlu0 %237, %v220
    %v239 = vpop.permute.xlu0 %238
    %v242 = vsel %vm111, %v209, 0
    %v245 = vsel %vm111, %v210, 0
    %v248 = vsel %vm111, %v211, 0
    %v251 = vsel %vm111, %v212, 0
    %253 = vmatpush.msra.mxu0 0.0
    %254 = vmatpush.msra.mxu0 0.0
    %255 = vmatpush.msra.mxu0 0.0
    %256 = vmatpush.msra.mxu0 0.0
    %257 = vmatpush.msra.mxu0 0.0
    %258 = vmatpush.msra.mxu0 0.0
    %259 = vmatpush.msra.mxu0 0.0
    %260 = vmatpush.msra.mxu0 0.0
    %261 = vmatpush.msra.mxu0 0.0
    %262 = vmatpush.msra.mxu0 0.0
    %263 = vmatpush.msra.mxu0 0.0
    %264 = vmatpush.msra.mxu0 0.0
    %265 = vmatpush.msra.mxu0 %v216
    %266 = vmatpush.msra.mxu0 %v215
    %267 = vmatpush.msra.mxu0 %v214
    %268 = vmatpush.msra.mxu0 %v213
    %269 = vmatmul.f32.gmra.mxu0 %v242
    %v270 = vpop.f32.mrf.mxu0
    %v271 = vadd.f32 %v224, %v270
    %272 = vmatmul.f32.gmra.mxu0 %v245
    %v273 = vpop.f32.mrf.mxu0
    %v274 = vadd.f32 %v229, %v273
    %275 = vmatmul.f32.gmra.mxu0 %v248
    %v276 = vpop.f32.mrf.mxu0
    %v277 = vadd.f32 %v234, %v276
    %278 = vmatmul.f32.gmra.mxu0 %v251
    %v279 = vpop.f32.mrf.mxu0
    %v280 = vadd.f32 %v239, %v279
    %281 = vdwg.mxu0
    %v282 = vtanh.pop %v271
    %v283 = vtanh.pop %v274
    %v284 = vtanh.pop %v277
    %v285 = vtanh.pop %v280
    %v286 = vsub.f32 1.0, %v205
    %v287 = vsub.f32 1.0, %v206
    %v288 = vsub.f32 1.0, %v207
    %v289 = vsub.f32 1.0, %v208
    %v290 = vmul.f32 %v286, %v39
    %v291 = vmul.f32 %v287, %v40
    %v292 = vmul.f32 %v288, %v41
    %v293 = vmul.f32 %v289, %v42
    %v294 = vmul.f32 %v205, %v282
    %v295 = vmul.f32 %v206, %v283
    %v296 = vmul.f32 %v207, %v284
    %v297 = vmul.f32 %v208, %v285
    %v298 = vadd.f32 %v290, %v294
    %v299 = vadd.f32 %v291, %v295
    %v300 = vadd.f32 %v292, %v296
    %v301 = vadd.f32 %v293, %v297
    %302 = vxpose.xlu0.b32.start [1/16] %v298, 128
    %303 = vxpose.xlu0.b32.cont [2/16] %v299, 128
    %304 = vxpose.xlu0.b32.cont [3/16] %v300, 128
    %305 = vxpose.xlu0.b32.cont [4/16] %v301, 128
    %306 = vxpose.xlu0.b32.cont [5/16] 0.0, 128
    %307 = vxpose.xlu0.b32.cont [6/16] 0.0, 128
    %308 = vxpose.xlu0.b32.cont [7/16] 0.0, 128
    %309 = vxpose.xlu0.b32.cont [8/16] 0.0, 128
    %310 = vxpose.xlu0.b32.cont [9/16] 0.0, 128
    %311 = vxpose.xlu0.b32.cont [10/16] 0.0, 128
    %312 = vxpose.xlu0.b32.cont [11/16] 0.0, 128
    %313 = vxpose.xlu0.b32.cont [12/16] 0.0, 128
    %314 = vxpose.xlu0.b32.cont [13/16] 0.0, 128
    %315 = vxpose.xlu0.b32.cont [14/16] 0.0, 128
    %316 = vxpose.xlu0.b32.cont [15/16] 0.0, 128
    %317 = vxpose.xlu0.b32.end [16/16] 0.0, 128
    %v318 = vpop.trf.xlu0
    %v319 = vpop.trf.xlu0
    %v320 = vpop.trf.xlu0
    %v321 = vpop.trf.xlu0
    %v322 = vpop.trf.xlu0
    %v323 = vpop.trf.xlu0
    %v324 = vpop.trf.xlu0
    %v325 = vpop.trf.xlu0
    %v326 = vpop.trf.xlu0
    %v327 = vpop.trf.xlu0
    %v328 = vpop.trf.xlu0
    %v329 = vpop.trf.xlu0
    %v330 = vpop.trf.xlu0
    %v331 = vpop.trf.xlu0
    %v332 = vpop.trf.xlu0
    %v333 = vpop.trf.xlu0
    %334 = vst.msk [vmem:[#allocation2] sm:$0xff] %vm111, %v318
    %335 = vst.msk [vmem:[#allocation2 + $0x8] sm:$0xff] %vm111, %v319
    // Predicated region
    $region22: #{propogator.1} parent=1 // pred_check
      _
    $region23: #{propogator.1} parent=1 // pred_check_branch
      %337 = sbr.rel (0) target = $region25
    $region24: #{propogator.1} parent=1 // pred_region
      %339 = vsyncadd [#allocation3], 0
      %s340 = sshll.u32 [#allocation2], 4
      %s341 = int_to_ptr.vmem [resolvable:$true] %s340
      %s342 = sshll.u32 %s5, 4
      %s343 = int_to_ptr.hbm [resolvable:$true] %s342
      %348 = dma.vmem_to_hbm [thread:$0]  %s341, 256, %s343, [#allocation3], 128, 128, 8
    $region25: #{propogator.1} parent=1 // pred_fallthru
      _
    // Predicated region
    $region26: #{propogator.1} parent=1 // pred_check
      _
    $region27: #{propogator.1} parent=1 // pred_check_branch
      %350 = sbr.rel (0) target = $region29
    $region28: #{propogator.1} parent=1 // pred_region
      %352 = dma.done [#allocation3], 256
    $region29: #{propogator.1} parent=1 // pred_fallthru
      _
    %353 = vsyncpa [#allocation3], 1

</llo_original>
